<compile_context>
chip_gen: v7x
topology: tpu7x:2x2x1
jax: 0.10.0
libtpu: 0.0.40
codegen_flags: <defaults>
</compile_context>

<pallas_src>
import jax
import jax.numpy as jnp
from jax.experimental import pallas as pl
from jax.experimental.pallas import tpu as pltpu

_LANE = 128
_TARGET_TILE_BYTES = 4 * 1024 * 1024    # ~4 MiB per pipeline buffer
_VMEM_LIMIT_BYTES = 32 * 1024 * 1024    # safe on v5e/v6e (128 MiB) and v7x (64 MiB)


def _round_up(n: int, m: int) -> int:
    return ((n + m - 1) // m) * m


def _sublane_multiple(dtype) -> int:
    # 8 for 4-byte, 16 for 2-byte, 32 for 1-byte dtypes (sub-32-bit packs sublanes).
    itemsize = jnp.dtype(dtype).itemsize
    return max(8, 32 // itemsize)


def tcl_kernel(up_ref, x_ref, o_ref):
    # up_ref: SMEM scalar (shape (1,), f32). x_ref / o_ref: (tm, lanes) VMEM tiles.
    x = x_ref[...]
    up = up_ref[0].astype(x.dtype)
    zero = jnp.zeros((), x.dtype)
    # Literal PyTorch formula: up - relu(up - relu(x))  (== clamp(x, 0, up)).
    y = jnp.maximum(x, zero)
    y = jnp.maximum(up - y, zero)
    o_ref[...] = up - y


def _dimension_semantics_options():
    """Preferred-then-fallback dimension_semantics for the row axis."""
    try:
        kind = jax.devices()[0].device_kind.lower()
    except Exception:  # pragma: no cover
        kind = ""
    if "v7" in kind:
        # Two TensorCores per chip: actually split the row grid across both.
        return ((pltpu.CORE_PARALLEL,), ("parallel",))
    return (("parallel",),)


def _tcl_call(x2d: jax.Array, up_f32: jax.Array, dim_sems) -> jax.Array:
    rows, cols = x2d.shape
    dtype = x2d.dtype
    itemsize = jnp.dtype(dtype).itemsize
    sub = _sublane_multiple(dtype)

    # Biggest tile that stays near _TARGET_TILE_BYTES per buffer.
    tm_cap = max(sub, (_TARGET_TILE_BYTES // max(1, cols * itemsize)) // sub * sub)
    tm = min(tm_cap, _round_up(rows, sub))
    grid = (pl.cdiv(rows, tm),)

    total = rows * cols
    cost = pl.CostEstimate(
        flops=4 * total,
        transcendentals=0,
        bytes_accessed=2 * total * itemsize,
    )

    return pl.pallas_call(
        tcl_kernel,
        out_shape=jax.ShapeDtypeStruct((rows, cols), dtype),
        grid=grid,
        in_specs=[
            pl.BlockSpec(memory_space=pltpu.MemorySpace.SMEM),   # up scalar
            pl.BlockSpec((tm, cols), lambda i: (i, 0)),          # x tile
        ],
        out_specs=pl.BlockSpec((tm, cols), lambda i: (i, 0)),
        input_output_aliases={1: 0},   # write the result in place over x2d
        compiler_params=pltpu.CompilerParams(
            dimension_semantics=dim_sems,
            vmem_limit_bytes=_VMEM_LIMIT_BYTES,
        ),
        cost_estimate=cost,
    )(up_f32, x2d)


def tcl_forward(x: jax.Array, up: jax.Array) -> jax.Array:
    """Apply TCL elementwise. x: any shape (e.g. NCHW). up: (1,) float32-like."""
    orig_shape = x.shape
    total = x.size
    up_f32 = up.astype(jnp.float32).reshape(-1)

    if total % _LANE == 0:
        # Fast path: lane-dense (rows, 128) slab; unmasked full-width stores.
        x2d = x.reshape(total // _LANE, _LANE)
    else:
        # Ragged path: keep the native contiguous last dim as the lane axis.
        # No jnp.pad / slice copies; last-lane stores are masked instead.
        last = orig_shape[-1] if len(orig_shape) >= 1 else total
        x2d = x.reshape(-1, last)

    out2d = None
    last_err = None
    for sems in _dimension_semantics_options():
        try:
            out2d = _tcl_call(x2d, up_f32, sems)
            break
        except Exception as e:  # CORE_PARALLEL fallback path (v7x only)
            last_err = e
    if out2d is None:
        raise last_err

    return out2d.reshape(orig_shape)


def tcl_reference(x, up):
    # Literal PyTorch formula: up - relu(up - relu(x)).
    u = up[0].astype(x.dtype)
    x = jnp.maximum(x, 0.0)
    x = u - x
    x = jnp.maximum(x, 0.0)
    return u - x


if __name__ == "__main__":
    key = jax.random.PRNGKey(0)
    # Deterministic parameter init, matching nn.Parameter(torch.Tensor([4.0])).
    up = jnp.array([4.0], dtype=jnp.float32)

    k1, k2 = jax.random.split(key)

    # Case 1: NCHW input, total elements a multiple of 128 (lane-dense path).
    x1 = jax.random.normal(k1, (2, 4, 16, 16), dtype=jnp.float32) * 3.0
    ref1 = tcl_reference(x1, up)
    out1 = tcl_forward(x1, up)
    jax.block_until_ready(out1)
    assert out1.shape == x1.shape and out1.dtype == x1.dtype
    assert jnp.allclose(out1, ref1, atol=1e-6), "mismatch vs reference (case 1)"

    # Case 2: odd size (exercises the copy-free ragged path).
    x2 = jax.random.normal(k2, (1, 3, 5, 7), dtype=jnp.float32) * 3.0
    ref2 = tcl_reference(x2, up)
    out2 = tcl_forward(x2, up)
    jax.block_until_ready(out2)
    assert out2.shape == x2.shape and out2.dtype == x2.dtype
    assert jnp.allclose(out2, ref2, atol=1e-6), "mismatch vs reference (case 2)"

    print("KERNEL_OK")
</pallas_src>

<mosaic_0001>
module attributes {stable_mosaic.version = 11 : i64} {
  func.func @tcl_kernel(%arg0: i32, %arg1: memref<1xf32, #tpu.memory_space<smem>>, %arg2: memref<16x128xf32, #tpu.memory_space<vmem>>, %arg3: memref<16x128xf32, #tpu.memory_space<vmem>>) attributes {dimension_semantics = [#tpu.dimension_semantics<parallel>], iteration_bounds = array<i64: 1>, scalar_prefetch = 0 : i64, scratch_operands = 0 : i64, tpu.core_type = #tpu.core_type<tc>, window_params = [{transform_indices = @transform_0, window_bounds = array<i64: 1>}, {transform_indices = @transform_1, window_bounds = array<i64: 16, 128>}, {transform_indices = @transform_2, window_bounds = array<i64: 16, 128>}]} {
    %c0 = arith.constant 0 : index
    %c0_0 = arith.constant 0 : index
    %0 = vector.load %arg2[%c0, %c0_0] : memref<16x128xf32, #tpu.memory_space<vmem>>, vector<16x128xf32>
    %c0_1 = arith.constant 0 : index
    %1 = memref.load %arg1[%c0_1] : memref<1xf32, #tpu.memory_space<smem>>
    %cst = arith.constant 0.000000e+00 : f32
    %2 = vector.broadcast %cst : f32 to vector<16x128xf32>
    %3 = arith.maximumf %0, %2 : vector<16x128xf32>
    %4 = vector.broadcast %1 : f32 to vector<16x128xf32>
    %5 = arith.subf %4, %3 : vector<16x128xf32>
    %cst_2 = arith.constant 0.000000e+00 : f32
    %6 = vector.broadcast %cst_2 : f32 to vector<16x128xf32>
    %7 = arith.maximumf %5, %6 : vector<16x128xf32>
    %8 = vector.broadcast %1 : f32 to vector<16x128xf32>
    %9 = arith.subf %8, %7 : vector<16x128xf32>
    %c0_3 = arith.constant 0 : index
    %c0_4 = arith.constant 0 : index
    %10 = vector.load %arg3[%c0_3, %c0_4] : memref<16x128xf32, #tpu.memory_space<vmem>>, vector<16x128xf32>
    tpu.vector_store %arg3[%c0_3, %c0_4], %9 {strides = array<i32>} : memref<16x128xf32, #tpu.memory_space<vmem>>, vector<16x128xf32>,
    return
  }
  func.func @transform_0(%arg0: i32) -> i32 {
    %c0_i32 = arith.constant 0 : i32
    %c0_i32_0 = arith.constant 0 : i32
    return %c0_i32 : i32
  }
  func.func @transform_1(%arg0: i32) -> (i32, i32) {
    %c0_i32 = arith.constant 0 : i32
    %c0_i32_0 = arith.constant 0 : i32
    return %arg0, %c0_i32 : i32, i32
  }
  func.func @transform_2(%arg0: i32) -> (i32, i32) {
    %c0_i32 = arith.constant 0 : i32
    %c0_i32_0 = arith.constant 0 : i32
    return %arg0, %c0_i32 : i32, i32
  }
}

</mosaic_0001>

<llo_original>
// kernel: tpu_custom_call.1
$region0: #{tpu_custom_call.1}
  #allocation0 [shape = 'u32[]', space=smem, size = 0x4, offset = 0x4, fixed_abs, tag = 'smem constant byte address 0x4 - core index']
  #allocation1 [shape = 'u32[144,128]{1,0:T(1,128)}', space=vmem, size = 0x12000, scoped, tag = 'internal scratch']
  #allocation2 [shape = 'f32[1]{0:T(128)S(6)}', space=smem, size = 0x200, scoped, tag = 'scoped memory for tpu_custom_call.1']
  %s0 = inlined_call_operand.<no memory space> [shape: f32[1], index: 0, kind: input, shape index: {}]
  %s1 = inlined_call_operand.hbm [shape: f32[16,128], index: 1, kind: input, shape index: {}, may-alias: {1,2}]
  %s2 = inlined_call_operand.hbm [shape: f32[16,128], index: 2, kind: output, shape index: {}, may-alias: {1,2}]
  %s3 = sld [smem:[#allocation0]]
  $region22: #{tpu_custom_call.1} parent=0
    _
  %s5 = ssub.s32 1, %s3
  %s6 = scalar_select 0, %s5, %s3
  %7 = sst [smem:[#allocation2]] %s0
  $region1: #{tpu_custom_call.1} parent=0
    #allocation3 [shape = 'u8[8192]{0}', space=vmem, size = 0x2000, scoped, tag = 'input window, operand 1, single buffered']
    #allocation4 [shape = 's32[1]{0}', space=sflag, size = 0x4, scoped, tag = 'scoped memory for tpu_custom_call.1']
    #allocation5 [shape = 's32[1]{0}', space=sflag, size = 0x4, scoped, tag = 'scoped memory for tpu_custom_call.1']
    #allocation6 [shape = 'u8[8192]{0}', space=vmem, size = 0x2000, scoped, tag = 'output window, operand 0, single buffered']
    %8 = vsyncpa [#allocation4], 0
    %9 = vsyncpa [#allocation5], 0
    // Predicated region
    $region2: #{tpu_custom_call.1} parent=1 // pred_check
      _
    $region3: #{tpu_custom_call.1} parent=1 // pred_check_branch
      %11 = sbr.rel (0) target = $region5
    $region4: #{tpu_custom_call.1} parent=1 // pred_region
      _
    $region5: #{tpu_custom_call.1} parent=1 // pred_fallthru
      _
    // Predicated region
    $region6: #{tpu_custom_call.1} parent=1 // pred_check
      _
    $region7: #{tpu_custom_call.1} parent=1 // pred_check_branch
      %13 = sbr.rel (0) target = $region9
    $region8: #{tpu_custom_call.1} parent=1 // pred_region
      %s15 = ssub.s32 256, 256
      %16 = vsyncadd [#allocation4], %s15
      %s17 = sshll.u32 [#allocation3], 4
      %s18 = int_to_ptr.vmem [resolvable:$true] %s17
      %23 = dma.hbm_to_vmem [thread:$0]  %s1, 256, %s18, [#allocation4], 128, 128, 8
    $region9: #{tpu_custom_call.1} parent=1 // pred_fallthru
      _
    // Predicated region
    $region10: #{tpu_custom_call.1} parent=1 // pred_check
      _
    $region11: #{tpu_custom_call.1} parent=1 // pred_check_branch
      %25 = sbr.rel (0) target = $region13
    $region12: #{tpu_custom_call.1} parent=1 // pred_region
      %26 = dma.done [#allocation4], 256
    $region13: #{tpu_custom_call.1} parent=1 // pred_fallthru
      _
    %v27 = vld [vmem:[#allocation3] sm:$0xff]
    %v28 = vld [vmem:[#allocation3 + $0x8] sm:$0xff]
    %s29 = sld [smem:[#allocation2]]
    %v30 = vmax.f32 %v27, 0.0
    %v31 = vmax.f32 %v28, 0.0
    %v32 = vstv %s29
    %v33 = vsub.f32 %v32, %v30
    %v34 = vsub.f32 %v32, %v31
    %v35 = vmax.f32 %v33, 0.0
    %v36 = vmax.f32 %v34, 0.0
    %v37 = vsub.f32 %v32, %v35
    %v38 = vsub.f32 %v32, %v36
    %39 = vst [vmem:[#allocation6] sm:$0xff] %v37
    %40 = vst [vmem:[#allocation6 + $0x8] sm:$0xff] %v38
    // Predicated region
    $region14: #{tpu_custom_call.1} parent=1 // pred_check
      _
    $region15: #{tpu_custom_call.1} parent=1 // pred_check_branch
      %42 = sbr.rel (0) target = $region17
    $region16: #{tpu_custom_call.1} parent=1 // pred_region
      %s44 = ssub.s32 256, 256
      %45 = vsyncadd [#allocation5], %s44
      %s46 = sshll.u32 [#allocation6], 4
      %s47 = int_to_ptr.vmem [resolvable:$true] %s46
      %52 = dma.vmem_to_hbm [thread:$0]  %s47, 256, %s2, [#allocation5], 128, 128, 8
    $region17: #{tpu_custom_call.1} parent=1 // pred_fallthru
      _
    // Predicated region
    $region18: #{tpu_custom_call.1} parent=1 // pred_check
      _
    $region19: #{tpu_custom_call.1} parent=1 // pred_check_branch
      %54 = sbr.rel (0) target = $region21
    $region20: #{tpu_custom_call.1} parent=1 // pred_region
      %55 = dma.done [#allocation5], 256
    $region21: #{tpu_custom_call.1} parent=1 // pred_fallthru
      _
    %56 = vsyncpa [#allocation4], 1
    %57 = vsyncpa [#allocation5], 1

</llo_original>
